<compile_context>
chip_gen: v6e
topology: v6e:2x2x1
jax: 0.10.0
libtpu: 0.0.40
codegen_flags: <defaults>
</compile_context>

<pallas_src>
import functools

import jax
import jax.numpy as jnp
from jax.experimental import pallas as pl
from jax.experimental.pallas import tpu as pltpu


# PyTorch nn.LSTM gate order is (i, f, g, o); we regroup to (i, f, o, g) so the
# three sigmoid gates are contiguous.
GATE_PERM = (0, 1, 3, 2)


def _lstm_kernel(x_ref, wih_ref, whh_ref, b_ref, wfc_ref, bfc_ref, out_ref, *, seq_len):
    # x_ref:   (T*Bp, I)  time-major, batch-padded, flattened input
    # wih_ref: (I, 4H)    fused input->gate weights (gate order i, f, o, g)
    # whh_ref: (H, 4H)    fused hidden->gate weights (gate order i, f, o, g)
    # b_ref:   (1, 4H)    combined bias b_ih + b_hh (same gate order)
    # wfc_ref: (H, Cp)    final linear weight, transposed + lane-padded
    # bfc_ref: (1, Cp)    final linear bias, lane-padded
    # out_ref: (Bp, Cp)
    bp = out_ref.shape[0]
    h_dim = whh_ref.shape[0]

    whh = whh_ref[...]                                       # load once, reused every step

    # Input projection + bias for ALL timesteps, off the serial critical path.
    xg = jnp.dot(x_ref[...], wih_ref[...],
                 preferred_element_type=jnp.float32) + b_ref[...]   # (T*Bp, 4H)

    h = jnp.zeros((bp, h_dim), jnp.float32)
    c = jnp.zeros((bp, h_dim), jnp.float32)

    for t in range(seq_len):                                 # static full unroll (T is small)
        gates = xg[t * bp:(t + 1) * bp, :] + jnp.dot(
            h, whh, preferred_element_type=jnp.float32)      # (Bp, 4H), single MXU push
        ifo = jax.nn.sigmoid(gates[:, :3 * h_dim])           # one EUP pass over i, f, o
        g_g = jnp.tanh(gates[:, 3 * h_dim:])                 # one EUP pass over g
        i_g = ifo[:, :h_dim]
        f_g = ifo[:, h_dim:2 * h_dim]
        o_g = ifo[:, 2 * h_dim:3 * h_dim]
        c = f_g * c + i_g * g_g
        h = o_g * jnp.tanh(c)

    # Final FC on the last hidden state; Cp is a multiple of 128 -> unmasked lane-dense store.
    out_ref[...] = jnp.dot(h, wfc_ref[...],
                           preferred_element_type=jnp.float32) + bfc_ref[...]


@jax.jit
def lstm_forward(x, w_ih, w_hh, b_ih, b_hh, w_fc, b_fc):
    """x: (B, T, I) batch-first, parameters in PyTorch nn.LSTM / nn.Linear layout."""
    B, T, I = x.shape
    H = w_hh.shape[1]              # w_hh: (4H, H)
    C = w_fc.shape[0]              # w_fc: (C, H)

    Bp = max(8, -(-B // 8) * 8)    # pad batch to a sublane multiple
    Cp = -(-C // 128) * 128        # pad classes to a lane multiple

    # --- parameter re-layout (plain JAX glue) ---------------------------------
    # Fuse the 4 gate blocks along the output axis, permuted to (i, f, o, g),
    # transposed so the kernel right-multiplies (x @ W == x @ W_pt^T in PyTorch).
    wih_cat = jnp.concatenate(
        [w_ih[g * H:(g + 1) * H, :].T for g in GATE_PERM], axis=1)         # (I, 4H)
    whh_cat = jnp.concatenate(
        [w_hh[g * H:(g + 1) * H, :].T for g in GATE_PERM], axis=1)         # (H, 4H)
    b_sum = b_ih + b_hh
    b_cat = jnp.concatenate(
        [b_sum[g * H:(g + 1) * H] for g in GATE_PERM]).reshape(1, 4 * H)   # (1, 4H)

    wfc_pad = jnp.zeros((H, Cp), jnp.float32).at[:, :C].set(w_fc.T)        # (H, Cp)
    bfc_pad = jnp.zeros((1, Cp), jnp.float32).at[:, :C].set(b_fc.reshape(1, C))

    # Time-major, batch-padded, flattened input: (T*Bp, I).
    x_p = jnp.zeros((Bp, T, I), jnp.float32).at[:B].set(x.astype(jnp.float32))
    x_tm = jnp.transpose(x_p, (1, 0, 2)).reshape(T * Bp, I)

    vmem = pl.BlockSpec(memory_space=pltpu.MemorySpace.VMEM)
    out_p = pl.pallas_call(
        functools.partial(_lstm_kernel, seq_len=T),
        out_shape=jax.ShapeDtypeStruct((Bp, Cp), jnp.float32),
        in_specs=[vmem] * 6,
        out_specs=vmem,
    )(x_tm, wih_cat, whh_cat, b_cat, wfc_pad, bfc_pad)

    return out_p[:B, :C]


def _reference_forward(x, w_ih, w_hh, b_ih, b_hh, w_fc, b_fc):
    """Pure-JAX reference mirroring torch.nn.LSTM (gate order i,f,g,o) + Linear."""
    B, T, I = x.shape
    H = w_hh.shape[1]
    h = jnp.zeros((B, H), jnp.float32)
    c = jnp.zeros((B, H), jnp.float32)
    for t in range(T):
        gates = x[:, t, :] @ w_ih.T + b_ih + h @ w_hh.T + b_hh     # (B, 4H)
        i_g = jax.nn.sigmoid(gates[:, 0 * H:1 * H])
        f_g = jax.nn.sigmoid(gates[:, 1 * H:2 * H])
        g_g = jnp.tanh(gates[:, 2 * H:3 * H])
        o_g = jax.nn.sigmoid(gates[:, 3 * H:4 * H])
        c = f_g * c + i_g * g_g
        h = o_g * jnp.tanh(c)
    return h @ w_fc.T + b_fc


if __name__ == "__main__":
    # Module hyper-parameters (matching the PyTorch script).
    input_size, hidden_size, num_classes = 1, 64, 1
    batch, seq = 2, 8

    key = jax.random.PRNGKey(0)
    ks = jax.random.split(key, 7)
    bound = 1.0 / jnp.sqrt(hidden_size)   # PyTorch default init range

    # nn.LSTM parameter shapes (num_layers=1): gate order i, f, g, o.
    w_ih = jax.random.uniform(ks[0], (4 * hidden_size, input_size), jnp.float32, -bound, bound)
    w_hh = jax.random.uniform(ks[1], (4 * hidden_size, hidden_size), jnp.float32, -bound, bound)
    b_ih = jax.random.uniform(ks[2], (4 * hidden_size,), jnp.float32, -bound, bound)
    b_hh = jax.random.uniform(ks[3], (4 * hidden_size,), jnp.float32, -bound, bound)
    # nn.Linear(hidden_size, num_classes)
    w_fc = jax.random.uniform(ks[4], (num_classes, hidden_size), jnp.float32, -bound, bound)
    b_fc = jax.random.uniform(ks[5], (num_classes,), jnp.float32, -bound, bound)

    x = jax.random.normal(ks[6], (batch, seq, input_size), jnp.float32)

    out = lstm_forward(x, w_ih, w_hh, b_ih, b_hh, w_fc, b_fc)
    out = jax.block_until_ready(out)

    ref = _reference_forward(x, w_ih, w_hh, b_ih, b_hh, w_fc, b_fc)
    assert out.shape == (batch, num_classes)
    assert jnp.allclose(out, ref, atol=1e-5, rtol=1e-5), (out, ref)
    print("KERNEL_OK")
</pallas_src>

<mosaic_0001>
module attributes {stable_mosaic.version = 11 : i64} {
  func.func @_lstm_kernel(%arg0: memref<64x1xf32, #tpu.memory_space<vmem>>, %arg1: memref<1x256xf32, #tpu.memory_space<vmem>>, %arg2: memref<64x256xf32, #tpu.memory_space<vmem>>, %arg3: memref<1x256xf32, #tpu.memory_space<vmem>>, %arg4: memref<64x128xf32, #tpu.memory_space<vmem>>, %arg5: memref<1x128xf32, #tpu.memory_space<vmem>>, %arg6: memref<8x128xf32, #tpu.memory_space<vmem>>) attributes {dimension_semantics = [], scalar_prefetch = 0 : i64, scratch_operands = 0 : i64, tpu.core_type = #tpu.core_type<tc>} {
    %c0 = arith.constant 0 : index
    %c0_0 = arith.constant 0 : index
    %0 = vector.load %arg2[%c0, %c0_0] : memref<64x256xf32, #tpu.memory_space<vmem>>, vector<64x256xf32>
    %c0_1 = arith.constant 0 : index
    %c0_2 = arith.constant 0 : index
    %1 = vector.load %arg0[%c0_1, %c0_2] : memref<64x1xf32, #tpu.memory_space<vmem>>, vector<64x1xf32>
    %c0_3 = arith.constant 0 : index
    %c0_4 = arith.constant 0 : index
    %2 = vector.load %arg1[%c0_3, %c0_4] : memref<1x256xf32, #tpu.memory_space<vmem>>, vector<1x256xf32>
    %cst = arith.constant dense<0.000000e+00> : vector<64x256xf32>
    %3 = tpu.matmul %1, %2, %cst {dimension_numbers = #tpu.dot_dimension_numbers<[1], [0], [0], [1], [0, 0, 1, 1], [], []>} : vector<64x1xf32>, vector<1x256xf32>, vector<64x256xf32> -> vector<64x256xf32>
    %c0_5 = arith.constant 0 : index
    %c0_6 = arith.constant 0 : index
    %4 = vector.load %arg3[%c0_5, %c0_6] : memref<1x256xf32, #tpu.memory_space<vmem>>, vector<1x256xf32>
    %5 = vector.broadcast %4 : vector<1x256xf32> to vector<64x256xf32>
    %6 = arith.addf %3, %5 : vector<64x256xf32>
    %cst_7 = arith.constant 0.000000e+00 : f32
    %7 = vector.broadcast %cst_7 : f32 to vector<8x64xf32>
    %cst_8 = arith.constant 0.000000e+00 : f32
    %8 = vector.broadcast %cst_8 : f32 to vector<8x64xf32>
    %9 = vector.extract_strided_slice %6 {offsets = [0, 0], sizes = [8, 256], strides = [1, 1]} : vector<64x256xf32> to vector<8x256xf32>
    %cst_9 = arith.constant dense<0.000000e+00> : vector<8x256xf32>
    %10 = tpu.matmul %7, %0, %cst_9 {dimension_numbers = #tpu.dot_dimension_numbers<[1], [0], [0], [1], [0, 0, 1, 1], [], []>} : vector<8x64xf32>, vector<64x256xf32>, vector<8x256xf32> -> vector<8x256xf32>
    %11 = arith.addf %9, %10 : vector<8x256xf32>
    %12 = vector.extract_strided_slice %11 {offsets = [0, 0], sizes = [8, 192], strides = [1, 1]} : vector<8x256xf32> to vector<8x192xf32>
    %13 = arith.negf %12 : vector<8x192xf32>
    %14 = math.exp %13 : vector<8x192xf32>
    %cst_10 = arith.constant 1.000000e+00 : f32
    %15 = vector.broadcast %cst_10 : f32 to vector<8x192xf32>
    %16 = arith.addf %15, %14 : vector<8x192xf32>
    %17 = arith.divf %15, %16 : vector<8x192xf32>
    %18 = vector.extract_strided_slice %11 {offsets = [0, 192], sizes = [8, 64], strides = [1, 1]} : vector<8x256xf32> to vector<8x64xf32>
    %19 = math.tanh %18 : vector<8x64xf32>
    %20 = vector.extract_strided_slice %17 {offsets = [0, 0], sizes = [8, 64], strides = [1, 1]} : vector<8x192xf32> to vector<8x64xf32>
    %21 = vector.extract_strided_slice %17 {offsets = [0, 64], sizes = [8, 64], strides = [1, 1]} : vector<8x192xf32> to vector<8x64xf32>
    %22 = vector.extract_strided_slice %17 {offsets = [0, 128], sizes = [8, 64], strides = [1, 1]} : vector<8x192xf32> to vector<8x64xf32>
    %23 = arith.mulf %21, %8 : vector<8x64xf32>
    %24 = arith.mulf %20, %19 : vector<8x64xf32>
    %25 = arith.addf %23, %24 : vector<8x64xf32>
    %26 = math.tanh %25 : vector<8x64xf32>
    %27 = arith.mulf %22, %26 : vector<8x64xf32>
    %28 = vector.extract_strided_slice %6 {offsets = [8, 0], sizes = [8, 256], strides = [1, 1]} : vector<64x256xf32> to vector<8x256xf32>
    %cst_11 = arith.constant dense<0.000000e+00> : vector<8x256xf32>
    %29 = tpu.matmul %27, %0, %cst_11 {dimension_numbers = #tpu.dot_dimension_numbers<[1], [0], [0], [1], [0, 0, 1, 1], [], []>} : vector<8x64xf32>, vector<64x256xf32>, vector<8x256xf32> -> vector<8x256xf32>
    %30 = arith.addf %28, %29 : vector<8x256xf32>
    %31 = vector.extract_strided_slice %30 {offsets = [0, 0], sizes = [8, 192], strides = [1, 1]} : vector<8x256xf32> to vector<8x192xf32>
    %32 = arith.negf %31 : vector<8x192xf32>
    %33 = math.exp %32 : vector<8x192xf32>
    %cst_12 = arith.constant 1.000000e+00 : f32
    %34 = vector.broadcast %cst_12 : f32 to vector<8x192xf32>
    %35 = arith.addf %34, %33 : vector<8x192xf32>
    %36 = arith.divf %34, %35 : vector<8x192xf32>
    %37 = vector.extract_strided_slice %30 {offsets = [0, 192], sizes = [8, 64], strides = [1, 1]} : vector<8x256xf32> to vector<8x64xf32>
    %38 = math.tanh %37 : vector<8x64xf32>
    %39 = vector.extract_strided_slice %36 {offsets = [0, 0], sizes = [8, 64], strides = [1, 1]} : vector<8x192xf32> to vector<8x64xf32>
    %40 = vector.extract_strided_slice %36 {offsets = [0, 64], sizes = [8, 64], strides = [1, 1]} : vector<8x192xf32> to vector<8x64xf32>
    %41 = vector.extract_strided_slice %36 {offsets = [0, 128], sizes = [8, 64], strides = [1, 1]} : vector<8x192xf32> to vector<8x64xf32>
    %42 = arith.mulf %40, %25 : vector<8x64xf32>
    %43 = arith.mulf %39, %38 : vector<8x64xf32>
    %44 = arith.addf %42, %43 : vector<8x64xf32>
    %45 = math.tanh %44 : vector<8x64xf32>
    %46 = arith.mulf %41, %45 : vector<8x64xf32>
    %47 = vector.extract_strided_slice %6 {offsets = [16, 0], sizes = [8, 256], strides = [1, 1]} : vector<64x256xf32> to vector<8x256xf32>
    %cst_13 = arith.constant dense<0.000000e+00> : vector<8x256xf32>
    %48 = tpu.matmul %46, %0, %cst_13 {dimension_numbers = #tpu.dot_dimension_numbers<[1], [0], [0], [1], [0, 0, 1, 1], [], []>} : vector<8x64xf32>, vector<64x256xf32>, vector<8x256xf32> -> vector<8x256xf32>
    %49 = arith.addf %47, %48 : vector<8x256xf32>
    %50 = vector.extract_strided_slice %49 {offsets = [0, 0], sizes = [8, 192], strides = [1, 1]} : vector<8x256xf32> to vector<8x192xf32>
    %51 = arith.negf %50 : vector<8x192xf32>
    %52 = math.exp %51 : vector<8x192xf32>
    %cst_14 = arith.constant 1.000000e+00 : f32
    %53 = vector.broadcast %cst_14 : f32 to vector<8x192xf32>
    %54 = arith.addf %53, %52 : vector<8x192xf32>
    %55 = arith.divf %53, %54 : vector<8x192xf32>
    %56 = vector.extract_strided_slice %49 {offsets = [0, 192], sizes = [8, 64], strides = [1, 1]} : vector<8x256xf32> to vector<8x64xf32>
    %57 = math.tanh %56 : vector<8x64xf32>
    %58 = vector.extract_strided_slice %55 {offsets = [0, 0], sizes = [8, 64], strides = [1, 1]} : vector<8x192xf32> to vector<8x64xf32>
    %59 = vector.extract_strided_slice %55 {offsets = [0, 64], sizes = [8, 64], strides = [1, 1]} : vector<8x192xf32> to vector<8x64xf32>
    %60 = vector.extract_strided_slice %55 {offsets = [0, 128], sizes = [8, 64], strides = [1, 1]} : vector<8x192xf32> to vector<8x64xf32>
    %61 = arith.mulf %59, %44 : vector<8x64xf32>
    %62 = arith.mulf %58, %57 : vector<8x64xf32>
    %63 = arith.addf %61, %62 : vector<8x64xf32>
    %64 = math.tanh %63 : vector<8x64xf32>
    %65 = arith.mulf %60, %64 : vector<8x64xf32>
    %66 = vector.extract_strided_slice %6 {offsets = [24, 0], sizes = [8, 256], strides = [1, 1]} : vector<64x256xf32> to vector<8x256xf32>
    %cst_15 = arith.constant dense<0.000000e+00> : vector<8x256xf32>
    %67 = tpu.matmul %65, %0, %cst_15 {dimension_numbers = #tpu.dot_dimension_numbers<[1], [0], [0], [1], [0, 0, 1, 1], [], []>} : vector<8x64xf32>, vector<64x256xf32>, vector<8x256xf32> -> vector<8x256xf32>
    %68 = arith.addf %66, %67 : vector<8x256xf32>
    %69 = vector.extract_strided_slice %68 {offsets = [0, 0], sizes = [8, 192], strides = [1, 1]} : vector<8x256xf32> to vector<8x192xf32>
    %70 = arith.negf %69 : vector<8x192xf32>
    %71 = math.exp %70 : vector<8x192xf32>
    %cst_16 = arith.constant 1.000000e+00 : f32
    %72 = vector.broadcast %cst_16 : f32 to vector<8x192xf32>
    %73 = arith.addf %72, %71 : vector<8x192xf32>
    %74 = arith.divf %72, %73 : vector<8x192xf32>
    %75 = vector.extract_strided_slice %68 {offsets = [0, 192], sizes = [8, 64], strides = [1, 1]} : vector<8x256xf32> to vector<8x64xf32>
    %76 = math.tanh %75 : vector<8x64xf32>
    %77 = vector.extract_strided_slice %74 {offsets = [0, 0], sizes = [8, 64], strides = [1, 1]} : vector<8x192xf32> to vector<8x64xf32>
    %78 = vector.extract_strided_slice %74 {offsets = [0, 64], sizes = [8, 64], strides = [1, 1]} : vector<8x192xf32> to vector<8x64xf32>
    %79 = vector.extract_strided_slice %74 {offsets = [0, 128], sizes = [8, 64], strides = [1, 1]} : vector<8x192xf32> to vector<8x64xf32>
    %80 = arith.mulf %78, %63 : vector<8x64xf32>
    %81 = arith.mulf %77, %76 : vector<8x64xf32>
    %82 = arith.addf %80, %81 : vector<8x64xf32>
    %83 = math.tanh %82 : vector<8x64xf32>
    %84 = arith.mulf %79, %83 : vector<8x64xf32>
    %85 = vector.extract_strided_slice %6 {offsets = [32, 0], sizes = [8, 256], strides = [1, 1]} : vector<64x256xf32> to vector<8x256xf32>
    %cst_17 = arith.constant dense<0.000000e+00> : vector<8x256xf32>
    %86 = tpu.matmul %84, %0, %cst_17 {dimension_numbers = #tpu.dot_dimension_numbers<[1], [0], [0], [1], [0, 0, 1, 1], [], []>} : vector<8x64xf32>, vector<64x256xf32>, vector<8x256xf32> -> vector<8x256xf32>
    %87 = arith.addf %85, %86 : vector<8x256xf32>
    %88 = vector.extract_strided_slice %87 {offsets = [0, 0], sizes = [8, 192], strides = [1, 1]} : vector<8x256xf32> to vector<8x192xf32>
    %89 = arith.negf %88 : vector<8x192xf32>
    %90 = math.exp %89 : vector<8x192xf32>
    %cst_18 = arith.constant 1.000000e+00 : f32
    %91 = vector.broadcast %cst_18 : f32 to vector<8x192xf32>
    %92 = arith.addf %91, %90 : vector<8x192xf32>
    %93 = arith.divf %91, %92 : vector<8x192xf32>
    %94 = vector.extract_strided_slice %87 {offsets = [0, 192], sizes = [8, 64], strides = [1, 1]} : vector<8x256xf32> to vector<8x64xf32>
    %95 = math.tanh %94 : vector<8x64xf32>
    %96 = vector.extract_strided_slice %93 {offsets = [0, 0], sizes = [8, 64], strides = [1, 1]} : vector<8x192xf32> to vector<8x64xf32>
    %97 = vector.extract_strided_slice %93 {offsets = [0, 64], sizes = [8, 64], strides = [1, 1]} : vector<8x192xf32> to vector<8x64xf32>
    %98 = vector.extract_strided_slice %93 {offsets = [0, 128], sizes = [8, 64], strides = [1, 1]} : vector<8x192xf32> to vector<8x64xf32>
    %99 = arith.mulf %97, %82 : vector<8x64xf32>
    %100 = arith.mulf %96, %95 : vector<8x64xf32>
    %101 = arith.addf %99, %100 : vector<8x64xf32>
    %102 = math.tanh %101 : vector<8x64xf32>
    %103 = arith.mulf %98, %102 : vector<8x64xf32>
    %104 = vector.extract_strided_slice %6 {offsets = [40, 0], sizes = [8, 256], strides = [1, 1]} : vector<64x256xf32> to vector<8x256xf32>
    %cst_19 = arith.constant dense<0.000000e+00> : vector<8x256xf32>
    %105 = tpu.matmul %103, %0, %cst_19 {dimension_numbers = #tpu.dot_dimension_numbers<[1], [0], [0], [1], [0, 0, 1, 1], [], []>} : vector<8x64xf32>, vector<64x256xf32>, vector<8x256xf32> -> vector<8x256xf32>
    %106 = arith.addf %104, %105 : vector<8x256xf32>
    %107 = vector.extract_strided_slice %106 {offsets = [0, 0], sizes = [8, 192], strides = [1, 1]} : vector<8x256xf32> to vector<8x192xf32>
    %108 = arith.negf %107 : vector<8x192xf32>
    %109 = math.exp %108 : vector<8x192xf32>
    %cst_20 = arith.constant 1.000000e+00 : f32
    %110 = vector.broadcast %cst_20 : f32 to vector<8x192xf32>
    %111 = arith.addf %110, %109 : vector<8x192xf32>
    %112 = arith.divf %110, %111 : vector<8x192xf32>
    %113 = vector.extract_strided_slice %106 {offsets = [0, 192], sizes = [8, 64], strides = [1, 1]} : vector<8x256xf32> to vector<8x64xf32>
    %114 = math.tanh %113 : vector<8x64xf32>
    %115 = vector.extract_strided_slice %112 {offsets = [0, 0], sizes = [8, 64], strides = [1, 1]} : vector<8x192xf32> to vector<8x64xf32>
    %116 = vector.extract_strided_slice %112 {offsets = [0, 64], sizes = [8, 64], strides = [1, 1]} : vector<8x192xf32> to vector<8x64xf32>
    %117 = vector.extract_strided_slice %112 {offsets = [0, 128], sizes = [8, 64], strides = [1, 1]} : vector<8x192xf32> to vector<8x64xf32>
    %118 = arith.mulf %116, %101 : vector<8x64xf32>
    %119 = arith.mulf %115, %114 : vector<8x64xf32>
    %120 = arith.addf %118, %119 : vector<8x64xf32>
    %121 = math.tanh %120 : vector<8x64xf32>
    %122 = arith.mulf %117, %121 : vector<8x64xf32>
    %123 = vector.extract_strided_slice %6 {offsets = [48, 0], sizes = [8, 256], strides = [1, 1]} : vector<64x256xf32> to vector<8x256xf32>
    %cst_21 = arith.constant dense<0.000000e+00> : vector<8x256xf32>
    %124 = tpu.matmul %122, %0, %cst_21 {dimension_numbers = #tpu.dot_dimension_numbers<[1], [0], [0], [1], [0, 0, 1, 1], [], []>} : vector<8x64xf32>, vector<64x256xf32>, vector<8x256xf32> -> vector<8x256xf32>
    %125 = arith.addf %123, %124 : vector<8x256xf32>
    %126 = vector.extract_strided_slice %125 {offsets = [0, 0], sizes = [8, 192], strides = [1, 1]} : vector<8x256xf32> to vector<8x192xf32>
    %127 = arith.negf %126 : vector<8x192xf32>
    %128 = math.exp %127 : vector<8x192xf32>
    %cst_22 = arith.constant 1.000000e+00 : f32
    %129 = vector.broadcast %cst_22 : f32 to vector<8x192xf32>
    %130 = arith.addf %129, %128 : vector<8x192xf32>
    %131 = arith.divf %129, %130 : vector<8x192xf32>
    %132 = vector.extract_strided_slice %125 {offsets = [0, 192], sizes = [8, 64], strides = [1, 1]} : vector<8x256xf32> to vector<8x64xf32>
    %133 = math.tanh %132 : vector<8x64xf32>
    %134 = vector.extract_strided_slice %131 {offsets = [0, 0], sizes = [8, 64], strides = [1, 1]} : vector<8x192xf32> to vector<8x64xf32>
    %135 = vector.extract_strided_slice %131 {offsets = [0, 64], sizes = [8, 64], strides = [1, 1]} : vector<8x192xf32> to vector<8x64xf32>
    %136 = vector.extract_strided_slice %131 {offsets = [0, 128], sizes = [8, 64], strides = [1, 1]} : vector<8x192xf32> to vector<8x64xf32>
    %137 = arith.mulf %135, %120 : vector<8x64xf32>
    %138 = arith.mulf %134, %133 : vector<8x64xf32>
    %139 = arith.addf %137, %138 : vector<8x64xf32>
    %140 = math.tanh %139 : vector<8x64xf32>
    %141 = arith.mulf %136, %140 : vector<8x64xf32>
    %142 = vector.extract_strided_slice %6 {offsets = [56, 0], sizes = [8, 256], strides = [1, 1]} : vector<64x256xf32> to vector<8x256xf32>
    %cst_23 = arith.constant dense<0.000000e+00> : vector<8x256xf32>
    %143 = tpu.matmul %141, %0, %cst_23 {dimension_numbers = #tpu.dot_dimension_numbers<[1], [0], [0], [1], [0, 0, 1, 1], [], []>} : vector<8x64xf32>, vector<64x256xf32>, vector<8x256xf32> -> vector<8x256xf32>
    %144 = arith.addf %142, %143 : vector<8x256xf32>
    %145 = vector.extract_strided_slice %144 {offsets = [0, 0], sizes = [8, 192], strides = [1, 1]} : vector<8x256xf32> to vector<8x192xf32>
    %146 = arith.negf %145 : vector<8x192xf32>
    %147 = math.exp %146 : vector<8x192xf32>
    %cst_24 = arith.constant 1.000000e+00 : f32
    %148 = vector.broadcast %cst_24 : f32 to vector<8x192xf32>
    %149 = arith.addf %148, %147 : vector<8x192xf32>
    %150 = arith.divf %148, %149 : vector<8x192xf32>
    %151 = vector.extract_strided_slice %144 {offsets = [0, 192], sizes = [8, 64], strides = [1, 1]} : vector<8x256xf32> to vector<8x64xf32>
    %152 = math.tanh %151 : vector<8x64xf32>
    %153 = vector.extract_strided_slice %150 {offsets = [0, 0], sizes = [8, 64], strides = [1, 1]} : vector<8x192xf32> to vector<8x64xf32>
    %154 = vector.extract_strided_slice %150 {offsets = [0, 64], sizes = [8, 64], strides = [1, 1]} : vector<8x192xf32> to vector<8x64xf32>
    %155 = vector.extract_strided_slice %150 {offsets = [0, 128], sizes = [8, 64], strides = [1, 1]} : vector<8x192xf32> to vector<8x64xf32>
    %156 = arith.mulf %154, %139 : vector<8x64xf32>
    %157 = arith.mulf %153, %152 : vector<8x64xf32>
    %158 = arith.addf %156, %157 : vector<8x64xf32>
    %159 = math.tanh %158 : vector<8x64xf32>
    %160 = arith.mulf %155, %159 : vector<8x64xf32>
    %c0_25 = arith.constant 0 : index
    %c0_26 = arith.constant 0 : index
    %161 = vector.load %arg4[%c0_25, %c0_26] : memref<64x128xf32, #tpu.memory_space<vmem>>, vector<64x128xf32>
    %cst_27 = arith.constant dense<0.000000e+00> : vector<8x128xf32>
    %162 = tpu.matmul %160, %161, %cst_27 {dimension_numbers = #tpu.dot_dimension_numbers<[1], [0], [0], [1], [0, 0, 1, 1], [], []>} : vector<8x64xf32>, vector<64x128xf32>, vector<8x128xf32> -> vector<8x128xf32>
    %c0_28 = arith.constant 0 : index
    %c0_29 = arith.constant 0 : index
    %163 = vector.load %arg5[%c0_28, %c0_29] : memref<1x128xf32, #tpu.memory_space<vmem>>, vector<1x128xf32>
    %164 = vector.broadcast %163 : vector<1x128xf32> to vector<8x128xf32>
    %165 = arith.addf %162, %164 : vector<8x128xf32>
    %c0_30 = arith.constant 0 : index
    %c0_31 = arith.constant 0 : index
    %166 = vector.load %arg6[%c0_30, %c0_31] : memref<8x128xf32, #tpu.memory_space<vmem>>, vector<8x128xf32>
    tpu.vector_store %arg6[%c0_30, %c0_31], %165 {strides = array<i32>} : memref<8x128xf32, #tpu.memory_space<vmem>>, vector<8x128xf32>,
    return
  }
}

</mosaic_0001>

<llo_original>
// kernel: lstm_forward.1
$region0: #{lstm_forward.1}
  #allocation0 [shape = 'u32[]', space=smem, size = 0x4, offset = 0x4, fixed_abs, tag = 'smem constant byte address 0x4 - core index']
  #allocation1 [shape = 'u32[144,128]{1,0:T(1,128)}', space=vmem, size = 0x12000, scoped, tag = 'internal scratch']
  %s0 = inlined_call_operand.vmem [shape: f32[64,1], index: 0, kind: input, shape index: {}]
  %s1 = inlined_call_operand.vmem [shape: f32[1,256], index: 1, kind: input, shape index: {}]
  %s2 = inlined_call_operand.vmem [shape: f32[64,256], index: 2, kind: input, shape index: {}]
  %s3 = inlined_call_operand.vmem [shape: f32[1,256], index: 3, kind: input, shape index: {}]
  %s4 = inlined_call_operand.vmem [shape: f32[64,128], index: 4, kind: input, shape index: {}]
  %s5 = inlined_call_operand.vmem [shape: f32[1,128], index: 5, kind: input, shape index: {}]
  %s6 = inlined_call_operand.vmem [shape: f32[8,128], index: 6, kind: output, shape index: {}]
  %s7 = sld [smem:[#allocation0]]
  $region34: #{lstm_forward.1} parent=0
    _
  %s9 = ssub.s32 1, %s7
  %s10 = scalar_select 0, %s9, %s7
  // Predicated region
  $region2: #{lstm_forward.1} parent=0 // pred_check
    _
  $region3: #{lstm_forward.1} parent=0 // pred_check_branch
    %12 = sbr.rel (0) target = $region5
  $region4: #{lstm_forward.1} parent=0 // pred_region
    _
  $region5: #{lstm_forward.1} parent=0 // pred_fallthru
    _
  // Predicated region
  $region6: #{lstm_forward.1} parent=0 // pred_check
    _
  $region7: #{lstm_forward.1} parent=0 // pred_check_branch
    %14 = sbr.rel (0) target = $region9
  $region8: #{lstm_forward.1} parent=0 // pred_region
    _
  $region9: #{lstm_forward.1} parent=0 // pred_fallthru
    _
  // Predicated region
  $region10: #{lstm_forward.1} parent=0 // pred_check
    _
  $region11: #{lstm_forward.1} parent=0 // pred_check_branch
    %16 = sbr.rel (0) target = $region13
  $region12: #{lstm_forward.1} parent=0 // pred_region
    _
  $region13: #{lstm_forward.1} parent=0 // pred_fallthru
    _
  // Predicated region
  $region14: #{lstm_forward.1} parent=0 // pred_check
    _
  $region15: #{lstm_forward.1} parent=0 // pred_check_branch
    %18 = sbr.rel (0) target = $region17
  $region16: #{lstm_forward.1} parent=0 // pred_region
    _
  $region17: #{lstm_forward.1} parent=0 // pred_fallthru
    _
  // Predicated region
  $region18: #{lstm_forward.1} parent=0 // pred_check
    _
  $region19: #{lstm_forward.1} parent=0 // pred_check_branch
    %20 = sbr.rel (0) target = $region21
  $region20: #{lstm_forward.1} parent=0 // pred_region
    _
  $region21: #{lstm_forward.1} parent=0 // pred_fallthru
    _
  // Predicated region
  $region22: #{lstm_forward.1} parent=0 // pred_check
    _
  $region23: #{lstm_forward.1} parent=0 // pred_check_branch
    %22 = sbr.rel (0) target = $region25
  $region24: #{lstm_forward.1} parent=0 // pred_region
    _
  $region25: #{lstm_forward.1} parent=0 // pred_fallthru
    _
  %v23 = vld [vmem:[%s2] sm:$0xff]
  %v24 = vld [vmem:[%s2 + $0x8] sm:$0xff]
  %v25 = vld [vmem:[%s2 + $0x10] sm:$0xff]
  %v26 = vld [vmem:[%s2 + $0x18] sm:$0xff]
  %v27 = vld [vmem:[%s2 + $0x20] sm:$0xff]
  %v28 = vld [vmem:[%s2 + $0x28] sm:$0xff]
  %v29 = vld [vmem:[%s2 + $0x30] sm:$0xff]
  %v30 = vld [vmem:[%s2 + $0x38] sm:$0xff]
  %v31 = vld [vmem:[%s2 + $0x40] sm:$0xff]
  %v32 = vld [vmem:[%s2 + $0x48] sm:$0xff]
  %v33 = vld [vmem:[%s2 + $0x50] sm:$0xff]
  %v34 = vld [vmem:[%s2 + $0x58] sm:$0xff]
  %v35 = vld [vmem:[%s2 + $0x60] sm:$0xff]
  %v36 = vld [vmem:[%s2 + $0x68] sm:$0xff]
  %v37 = vld [vmem:[%s2 + $0x70] sm:$0xff]
  %v38 = vld [vmem:[%s2 + $0x78] sm:$0xff]
  %v39 = vld [vmem:[%s0] sm:$0xff]
  %v40 = vld [vmem:[%s0 + $0x8] sm:$0xff]
  %v41 = vld [vmem:[%s0 + $0x10] sm:$0xff]
  %v42 = vld [vmem:[%s0 + $0x18] sm:$0xff]
  %v43 = vld [vmem:[%s0 + $0x20] sm:$0xff]
  %v44 = vld [vmem:[%s0 + $0x28] sm:$0xff]
  %v45 = vld [vmem:[%s0 + $0x30] sm:$0xff]
  %v46 = vld [vmem:[%s0 + $0x38] sm:$0xff]
  %v47 = vld [vmem:[%s1] sm:$0x3]
  %v48 = vld [vmem:[%s3] sm:$0x3]
  %v50 = vlaneseq
  %v51 = vshrl.u32 %v50, 7
  %v52 = vsub.s32 0, %v51
  %v53 = vrot.slane %v48, %v52
  %v54 = vlaneseq
  %v55 = vshrl.u32 %v54, 7
  %v56 = vsub.s32 1, %v55
  %v57 = vrot.slane %v48, %v56
  %v61 = vlaneseq
  %v62 = vshrl.u32 %v61, 7
  %v63 = vsub.s32 0, %v62
  %v64 = vrot.slane %v47, %v63
  %v65 = vlaneseq
  %v66 = vshrl.u32 %v65, 7
  %v67 = vsub.s32 1, %v66
  %v68 = vrot.slane %v47, %v67
  %vm69 = vcmask 7168
  %v71 = vsel %vm69, %v39, 0
  %v74 = vsel %vm69, %v40, 0
  %v77 = vsel %vm69, %v41, 0
  %v80 = vsel %vm69, %v42, 0
  %v83 = vsel %vm69, %v43, 0
  %v86 = vsel %vm69, %v44, 0
  %v89 = vsel %vm69, %v45, 0
  %v92 = vsel %vm69, %v46, 0
  %vm94 = vcmask 1040384
  %v95 = vsel %vm94, %v64, 0
  %v97 = vsel %vm94, %v68, 0
  %99 = vmatprep.subr.mxu0 0.0
  %100 = vmatpush1.msra.mxu0 0.0
  %101 = vmatprep.subr.mxu0 0.0
  %102 = vmatpush1.msra.mxu0 0.0
  %103 = vmatprep.subr.mxu0 0.0
  %104 = vmatpush1.msra.mxu0 0.0
  %105 = vmatprep.subr.mxu0 0.0
  %106 = vmatpush1.msra.mxu0 0.0
  %107 = vmatprep.subr.mxu0 0.0
  %108 = vmatpush1.msra.mxu0 0.0
  %109 = vmatprep.subr.mxu0 0.0
  %110 = vmatpush1.msra.mxu0 0.0
  %111 = vmatprep.subr.mxu0 0.0
  %112 = vmatpush1.msra.mxu0 0.0
  %113 = vmatprep.subr.mxu0 0.0
  %114 = vmatpush1.msra.mxu0 0.0
  %115 = vmatprep.subr.mxu0 0.0
  %116 = vmatpush1.msra.mxu0 0.0
  %117 = vmatprep.subr.mxu0 0.0
  %118 = vmatpush1.msra.mxu0 0.0
  %119 = vmatprep.subr.mxu0 0.0
  %120 = vmatpush1.msra.mxu0 0.0
  %121 = vmatprep.subr.mxu0 0.0
  %122 = vmatpush1.msra.mxu0 0.0
  %123 = vmatprep.subr.mxu0 0.0
  %124 = vmatpush1.msra.mxu0 0.0
  %125 = vmatprep.subr.mxu0 0.0
  %126 = vmatpush1.msra.mxu0 0.0
  %127 = vmatprep.subr.mxu0 0.0
  %128 = vmatpush1.msra.mxu0 0.0
  %129 = vmatprep.subr.mxu0 %v97
  %130 = vmatpush1.msra.mxu0 %v95
  %131 = vmatprep.subr.mxu0 0.0
  %132 = vmatpush2.msra.mxu0 0.0
  %133 = vmatprep.subr.mxu0 0.0
  %134 = vmatpush2.msra.mxu0 0.0
  %135 = vmatprep.subr.mxu0 0.0
  %136 = vmatpush2.msra.mxu0 0.0
  %137 = vmatprep.subr.mxu0 0.0
  %138 = vmatpush2.msra.mxu0 0.0
  %139 = vmatprep.subr.mxu0 0.0
  %140 = vmatpush2.msra.mxu0 0.0
  %141 = vmatprep.subr.mxu0 0.0
  %142 = vmatpush2.msra.mxu0 0.0
  %143 = vmatprep.subr.mxu0 0.0
  %144 = vmatpush2.msra.mxu0 0.0
  %145 = vmatprep.subr.mxu0 0.0
  %146 = vmatpush2.msra.mxu0 0.0
  %147 = vmatprep.subr.mxu0 0.0
  %148 = vmatpush2.msra.mxu0 0.0
  %149 = vmatprep.subr.mxu0 0.0
  %150 = vmatpush2.msra.mxu0 0.0
  %151 = vmatprep.subr.mxu0 0.0
  %152 = vmatpush2.msra.mxu0 0.0
  %153 = vmatprep.subr.mxu0 0.0
  %154 = vmatpush2.msra.mxu0 0.0
  %155 = vmatprep.subr.mxu0 0.0
  %156 = vmatpush2.msra.mxu0 0.0
  %157 = vmatprep.subr.mxu0 0.0
  %158 = vmatpush2.msra.mxu0 0.0
  %159 = vmatprep.subr.mxu0 0.0
  %160 = vmatpush2.msra.mxu0 0.0
  %161 = vmatprep.subr.mxu0 0.0
  %162 = vmatpush2.msra.mxu0 0.0
  %163 = vmatprep.mubr.f32.mxu0 0.0
  %164 = vmatmul.mubr.f32.gmra.mxu0 %v71
  %v165 = vpop.f32.mrf.mxu0
  %v166 = vadd.f32 %v53, %v165
  %v167 = vpop.f32.mrf.mxu0
  %v168 = vadd.f32 %v57, %v167
  %169 = vmatprep.mubr.f32.mxu0 0.0
  %170 = vmatmul.mubr.f32.gmra.mxu0 %v74
  %v171 = vpop.f32.mrf.mxu0
  %v172 = vadd.f32 %v53, %v171
  %v173 = vpop.f32.mrf.mxu0
  %v174 = vadd.f32 %v57, %v173
  %175 = vmatprep.mubr.f32.mxu0 0.0
  %176 = vmatmul.mubr.f32.gmra.mxu0 %v77
  %v177 = vpop.f32.mrf.mxu0
  %v178 = vadd.f32 %v53, %v177
  %v179 = vpop.f32.mrf.mxu0
  %v180 = vadd.f32 %v57, %v179
  %181 = vmatprep.mubr.f32.mxu0 0.0
  %182 = vmatmul.mubr.f32.gmra.mxu0 %v80
  %v183 = vpop.f32.mrf.mxu0
  %v184 = vadd.f32 %v53, %v183
  %v185 = vpop.f32.mrf.mxu0
  %v186 = vadd.f32 %v57, %v185
  %187 = vmatprep.mubr.f32.mxu0 0.0
  %188 = vmatmul.mubr.f32.gmra.mxu0 %v83
  %v189 = vpop.f32.mrf.mxu0
  %v190 = vadd.f32 %v53, %v189
  %v191 = vpop.f32.mrf.mxu0
  %v192 = vadd.f32 %v57, %v191
  %193 = vmatprep.mubr.f32.mxu0 0.0
  %194 = vmatmul.mubr.f32.gmra.mxu0 %v86
  %v195 = vpop.f32.mrf.mxu0
  %v196 = vadd.f32 %v53, %v195
  %v197 = vpop.f32.mrf.mxu0
  %v198 = vadd.f32 %v57, %v197
  %199 = vmatprep.mubr.f32.mxu0 0.0
  %200 = vmatmul.mubr.f32.gmra.mxu0 %v89
  %v201 = vpop.f32.mrf.mxu0
  %v202 = vadd.f32 %v53, %v201
  %v203 = vpop.f32.mrf.mxu0
  %v204 = vadd.f32 %v57, %v203
  %205 = vmatprep.mubr.f32.mxu0 0.0
  %206 = vmatmul.mubr.f32.gmra.mxu0 %v92
  %v207 = vpop.f32.mrf.mxu0
  %v208 = vadd.f32 %v53, %v207
  %v209 = vpop.f32.mrf.mxu0
  %v210 = vadd.f32 %v57, %v209
  %211 = vdwg.mxu0
  %vm212 = vcmask 523264
  %v214 = vsel %vm212, 0.0, 0
  %216 = vmatprep.subr.mxu0 0.0
  %217 = vmatpush1.msra.mxu0 0.0
  %218 = vmatprep.subr.mxu0 0.0
  %219 = vmatpush1.msra.mxu0 0.0
  %220 = vmatprep.subr.mxu0 0.0
  %221 = vmatpush1.msra.mxu0 0.0
  %222 = vmatprep.subr.mxu0 0.0
  %223 = vmatpush1.msra.mxu0 0.0
  %224 = vmatprep.subr.mxu0 0.0
  %225 = vmatpush1.msra.mxu0 0.0
  %226 = vmatprep.subr.mxu0 0.0
  %227 = vmatpush1.msra.mxu0 0.0
  %228 = vmatprep.subr.mxu0 0.0
  %229 = vmatpush1.msra.mxu0 0.0
  %230 = vmatprep.subr.mxu0 0.0
  %231 = vmatpush1.msra.mxu0 0.0
  %232 = vmatprep.subr.mxu0 %v38
  %233 = vmatpush1.msra.mxu0 %v37
  %234 = vmatprep.subr.mxu0 %v36
  %235 = vmatpush1.msra.mxu0 %v35
  %236 = vmatprep.subr.mxu0 %v34
  %237 = vmatpush1.msra.mxu0 %v33
  %238 = vmatprep.subr.mxu0 %v32
  %239 = vmatpush1.msra.mxu0 %v31
  %240 = vmatprep.subr.mxu0 %v30
  %241 = vmatpush1.msra.mxu0 %v29
  %242 = vmatprep.subr.mxu0 %v28
  %243 = vmatpush1.msra.mxu0 %v27
  %244 = vmatprep.subr.mxu0 %v26
  %245 = vmatpush1.msra.mxu0 %v25
  %246 = vmatprep.subr.mxu0 %v24
  %247 = vmatpush1.msra.mxu0 %v23
  %248 = vmatprep.subr.mxu0 0.0
  %249 = vmatpush2.msra.mxu0 0.0
  %250 = vmatprep.subr.mxu0 0.0
  %251 = vmatpush2.msra.mxu0 0.0
  %252 = vmatprep.subr.mxu0 0.0
  %253 = vmatpush2.msra.mxu0 0.0
  %254 = vmatprep.subr.mxu0 0.0
  %255 = vmatpush2.msra.mxu0 0.0
  %256 = vmatprep.subr.mxu0 0.0
  %257 = vmatpush2.msra.mxu0 0.0
  %258 = vmatprep.subr.mxu0 0.0
  %259 = vmatpush2.msra.mxu0 0.0
  %260 = vmatprep.subr.mxu0 0.0
  %261 = vmatpush2.msra.mxu0 0.0
  %262 = vmatprep.subr.mxu0 0.0
  %263 = vmatpush2.msra.mxu0 0.0
  %264 = vmatprep.subr.mxu0 0.0
  %265 = vmatpush2.msra.mxu0 0.0
  %266 = vmatprep.subr.mxu0 0.0
  %267 = vmatpush2.msra.mxu0 0.0
  %268 = vmatprep.subr.mxu0 0.0
  %269 = vmatpush2.msra.mxu0 0.0
  %270 = vmatprep.subr.mxu0 0.0
  %271 = vmatpush2.msra.mxu0 0.0
  %272 = vmatprep.subr.mxu0 0.0
  %273 = vmatpush2.msra.mxu0 0.0
  %274 = vmatprep.subr.mxu0 0.0
  %275 = vmatpush2.msra.mxu0 0.0
  %276 = vmatprep.subr.mxu0 0.0
  %277 = vmatpush2.msra.mxu0 0.0
  %278 = vmatprep.subr.mxu0 0.0
  %279 = vmatpush2.msra.mxu0 0.0
  %280 = vmatprep.mubr.f32.mxu0 0.0
  %281 = vmatmul.mubr.f32.gmra.mxu0 %v214
  %v282 = vpop.f32.mrf.mxu0
  %v283 = vadd.f32 0.0, %v282
  %v284 = vpop.f32.mrf.mxu0
  %v285 = vadd.f32 0.0, %v284
  %286 = vdwg.mxu0
  %v287 = vadd.f32 %v166, %v283
  %v288 = vadd.f32 %v168, %v285
  %v289 = vxor.u32 %v287, 2147483648
  %v290 = vxor.u32 %v288, 2147483648
  %v291 = vmul.f32 %v289, 1.442695
  %v292 = vpow.pop %v291
  %v293 = vmul.f32 %v290, 1.442695
  %v294 = vpow.pop %v293
  %v295 = vadd.f32 %v292, 1.0
  %v296 = vadd.f32 %v294, 1.0
  %v297 = vrcp.pop %v295
  %v298 = vmul.f32 1.0, %v297
  %v299 = vrcp.pop %v296
  %v300 = vmul.f32 1.0, %v299
  %v301 = vtanh.pop %v288
  %v302 = vmul.f32 %v298, 0.0
  %304 = vrot.lane.b32.xlu0 %v301, 64
  %v305 = vpop.permute.xlu0 %304
  %v307 = vmul.f32 %v298, %v305
  %309 = vrot.lane.b32.xlu0 %v307, 64
  %v310 = vpop.permute.xlu0 %309
  %v312 = vadd.f32 %v302, %v310
  %v313 = vtanh.pop %v312
  %315 = vrot.lane.b32.xlu0 %v313, 64
  %v316 = vpop.permute.xlu0 %315
  %v318 = vmul.f32 %v300, %v316
  %v320 = vsel %vm212, %v318, 0
  %322 = vmatprep.subr.mxu0 0.0
  %323 = vmatpush1.msra.mxu0 0.0
  %324 = vmatprep.subr.mxu0 0.0
  %325 = vmatpush1.msra.mxu0 0.0
  %326 = vmatprep.subr.mxu0 0.0
  %327 = vmatpush1.msra.mxu0 0.0
  %328 = vmatprep.subr.mxu0 0.0
  %329 = vmatpush1.msra.mxu0 0.0
  %330 = vmatprep.subr.mxu0 0.0
  %331 = vmatpush1.msra.mxu0 0.0
  %332 = vmatprep.subr.mxu0 0.0
  %333 = vmatpush1.msra.mxu0 0.0
  %334 = vmatprep.subr.mxu0 0.0
  %335 = vmatpush1.msra.mxu0 0.0
  %336 = vmatprep.subr.mxu0 0.0
  %337 = vmatpush1.msra.mxu0 0.0
  %338 = vmatprep.subr.mxu0 %v38
  %339 = vmatpush1.msra.mxu0 %v37
  %340 = vmatprep.subr.mxu0 %v36
  %341 = vmatpush1.msra.mxu0 %v35
  %342 = vmatprep.subr.mxu0 %v34
  %343 = vmatpush1.msra.mxu0 %v33
  %344 = vmatprep.subr.mxu0 %v32
  %345 = vmatpush1.msra.mxu0 %v31
  %346 = vmatprep.subr.mxu0 %v30
  %347 = vmatpush1.msra.mxu0 %v29
  %348 = vmatprep.subr.mxu0 %v28
  %349 = vmatpush1.msra.mxu0 %v27
  %350 = vmatprep.subr.mxu0 %v26
  %351 = vmatpush1.msra.mxu0 %v25
  %352 = vmatprep.subr.mxu0 %v24
  %353 = vmatpush1.msra.mxu0 %v23
  %354 = vmatprep.subr.mxu0 0.0
  %355 = vmatpush2.msra.mxu0 0.0
  %356 = vmatprep.subr.mxu0 0.0
  %357 = vmatpush2.msra.mxu0 0.0
  %358 = vmatprep.subr.mxu0 0.0
  %359 = vmatpush2.msra.mxu0 0.0
  %360 = vmatprep.subr.mxu0 0.0
  %361 = vmatpush2.msra.mxu0 0.0
  %362 = vmatprep.subr.mxu0 0.0
  %363 = vmatpush2.msra.mxu0 0.0
  %364 = vmatprep.subr.mxu0 0.0
  %365 = vmatpush2.msra.mxu0 0.0
  %366 = vmatprep.subr.mxu0 0.0
  %367 = vmatpush2.msra.mxu0 0.0
  %368 = vmatprep.subr.mxu0 0.0
  %369 = vmatpush2.msra.mxu0 0.0
  %370 = vmatprep.subr.mxu0 0.0
  %371 = vmatpush2.msra.mxu0 0.0
  %372 = vmatprep.subr.mxu0 0.0
  %373 = vmatpush2.msra.mxu0 0.0
  %374 = vmatprep.subr.mxu0 0.0
  %375 = vmatpush2.msra.mxu0 0.0
  %376 = vmatprep.subr.mxu0 0.0
  %377 = vmatpush2.msra.mxu0 0.0
  %378 = vmatprep.subr.mxu0 0.0
  %379 = vmatpush2.msra.mxu0 0.0
  %380 = vmatprep.subr.mxu0 0.0
  %381 = vmatpush2.msra.mxu0 0.0
  %382 = vmatprep.subr.mxu0 0.0
  %383 = vmatpush2.msra.mxu0 0.0
  %384 = vmatprep.subr.mxu0 0.0
  %385 = vmatpush2.msra.mxu0 0.0
  %386 = vmatprep.mubr.f32.mxu0 0.0
  %387 = vmatmul.mubr.f32.gmra.mxu0 %v320
  %v388 = vpop.f32.mrf.mxu0
  %v389 = vadd.f32 0.0, %v388
  %v390 = vpop.f32.mrf.mxu0
  %v391 = vadd.f32 0.0, %v390
  %392 = vdwg.mxu0
  %v393 = vadd.f32 %v172, %v389
  %v394 = vadd.f32 %v174, %v391
  %v395 = vxor.u32 %v393, 2147483648
  %v396 = vxor.u32 %v394, 2147483648
  %v397 = vmul.f32 %v395, 1.442695
  %v398 = vpow.pop %v397
  %v399 = vmul.f32 %v396, 1.442695
  %v400 = vpow.pop %v399
  %v401 = vadd.f32 %v398, 1.0
  %v402 = vadd.f32 %v400, 1.0
  %v403 = vrcp.pop %v401
  %v404 = vmul.f32 1.0, %v403
  %v405 = vrcp.pop %v402
  %v406 = vmul.f32 1.0, %v405
  %v407 = vtanh.pop %v394
  %v408 = vmul.f32 %v404, %v312
  %410 = vrot.lane.b32.xlu0 %v407, 64
  %v411 = vpop.permute.xlu0 %410
  %v413 = vmul.f32 %v404, %v411
  %415 = vrot.lane.b32.xlu0 %v413, 64
  %v416 = vpop.permute.xlu0 %415
  %v418 = vadd.f32 %v408, %v416
  %v419 = vtanh.pop %v418
  %421 = vrot.lane.b32.xlu0 %v419, 64
  %v422 = vpop.permute.xlu0 %421
  %v424 = vmul.f32 %v406, %v422
  %v426 = vsel %vm212, %v424, 0
  %428 = vmatprep.subr.mxu0 0.0
  %429 = vmatpush1.msra.mxu0 0.0
  %430 = vmatprep.subr.mxu0 0.0
  %431 = vmatpush1.msra.mxu0 0.0
  %432 = vmatprep.subr.mxu0 0.0
  %433 = vmatpush1.msra.mxu0 0.0
  %434 = vmatprep.subr.mxu0 0.0
  %435 = vmatpush1.msra.mxu0 0.0
  %436 = vmatprep.subr.mxu0 0.0
  %437 = vmatpush1.msra.mxu0 0.0
  %438 = vmatprep.subr.mxu0 0.0
  %439 = vmatpush1.msra.mxu0 0.0
  %440 = vmatprep.subr.mxu0 0.0
  %441 = vmatpush1.msra.mxu0 0.0
  %442 = vmatprep.subr.mxu0 0.0
  %443 = vmatpush1.msra.mxu0 0.0
  %444 = vmatprep.subr.mxu0 %v38
  %445 = vmatpush1.msra.mxu0 %v37
  %446 = vmatprep.subr.mxu0 %v36
  %447 = vmatpush1.msra.mxu0 %v35
  %448 = vmatprep.subr.mxu0 %v34
  %449 = vmatpush1.msra.mxu0 %v33
  %450 = vmatprep.subr.mxu0 %v32
  %451 = vmatpush1.msra.mxu0 %v31
  %452 = vmatprep.subr.mxu0 %v30
  %453 = vmatpush1.msra.mxu0 %v29
  %454 = vmatprep.subr.mxu0 %v28
  %455 = vmatpush1.msra.mxu0 %v27
  %456 = vmatprep.subr.mxu0 %v26
  %457 = vmatpush1.msra.mxu0 %v25
  %458 = vmatprep.subr.mxu0 %v24
  %459 = vmatpush1.msra.mxu0 %v23
  %460 = vmatprep.subr.mxu0 0.0
  %461 = vmatpush2.msra.mxu0 0.0
  %462 = vmatprep.subr.mxu0 0.0
  %463 = vmatpush2.msra.mxu0 0.0
  %464 = vmatprep.subr.mxu0 0.0
  %465 = vmatpush2.msra.mxu0 0.0
  %466 = vmatprep.subr.mxu0 0.0
  %467 = vmatpush2.msra.mxu0 0.0
  %468 = vmatprep.subr.mxu0 0.0
  %469 = vmatpush2.msra.mxu0 0.0
  %470 = vmatprep.subr.mxu0 0.0
  %471 = vmatpush2.msra.mxu0 0.0
  %472 = vmatprep.subr.mxu0 0.0
  %473 = vmatpush2.msra.mxu0 0.0
  %474 = vmatprep.subr.mxu0 0.0
  %475 = vmatpush2.msra.mxu0 0.0
  %476 = vmatprep.subr.mxu0 0.0
  %477 = vmatpush2.msra.mxu0 0.0
  %478 = vmatprep.subr.mxu0 0.0
  %479 = vmatpush2.msra.mxu0 0.0
  %480 = vmatprep.subr.mxu0 0.0
  %481 = vmatpush2.msra.mxu0 0.0
  %482 = vmatprep.subr.mxu0 0.0
  %483 = vmatpush2.msra.mxu0 0.0
  %484 = vmatprep.subr.mxu0 0.0
  %485 = vmatpush2.msra.mxu0 0.0
  %486 = vmatprep.subr.mxu0 0.0
  %487 = vmatpush2.msra.mxu0 0.0
  %488 = vmatprep.subr.mxu0 0.0
  %489 = vmatpush2.msra.mxu0 0.0
  %490 = vmatprep.subr.mxu0 0.0
  %491 = vmatpush2.msra.mxu0 0.0
  %492 = vmatprep.mubr.f32.mxu0 0.0
  %493 = vmatmul.mubr.f32.gmra.mxu0 %v426
  %v494 = vpop.f32.mrf.mxu0
  %v495 = vadd.f32 0.0, %v494
  %v496 = vpop.f32.mrf.mxu0
  %v497 = vadd.f32 0.0, %v496
  %498 = vdwg.mxu0
  %v499 = vadd.f32 %v178, %v495
  %v500 = vadd.f32 %v180, %v497
  %v501 = vxor.u32 %v499, 2147483648
  %v502 = vxor.u32 %v500, 2147483648
  %v503 = vmul.f32 %v501, 1.442695
  %v504 = vpow.pop %v503
  %v505 = vmul.f32 %v502, 1.442695
  %v506 = vpow.pop %v505
  %v507 = vadd.f32 %v504, 1.0
  %v508 = vadd.f32 %v506, 1.0
  %v509 = vrcp.pop %v507
  %v510 = vmul.f32 1.0, %v509
  %v511 = vrcp.pop %v508
  %v512 = vmul.f32 1.0, %v511
  %v513 = vtanh.pop %v500
  %v514 = vmul.f32 %v510, %v418
  %516 = vrot.lane.b32.xlu0 %v513, 64
  %v517 = vpop.permute.xlu0 %516
  %v519 = vmul.f32 %v510, %v517
  %521 = vrot.lane.b32.xlu0 %v519, 64
  %v522 = vpop.permute.xlu0 %521
  %v524 = vadd.f32 %v514, %v522
  %v525 = vtanh.pop %v524
  %527 = vrot.lane.b32.xlu0 %v525, 64
  %v528 = vpop.permute.xlu0 %527
  %v530 = vmul.f32 %v512, %v528
  %v532 = vsel %vm212, %v530, 0
  %534 = vmatprep.subr.mxu0 0.0
  %535 = vmatpush1.msra.mxu0 0.0
  %536 = vmatprep.subr.mxu0 0.0
  %537 = vmatpush1.msra.mxu0 0.0
  %538 = vmatprep.subr.mxu0 0.0
  %539 = vmatpush1.msra.mxu0 0.0
  %540 = vmatprep.subr.mxu0 0.0
  %541 = vmatpush1.msra.mxu0 0.0
  %542 = vmatprep.subr.mxu0 0.0
  %543 = vmatpush1.msra.mxu0 0.0
  %544 = vmatprep.subr.mxu0 0.0
  %545 = vmatpush1.msra.mxu0 0.0
  %546 = vmatprep.subr.mxu0 0.0
  %547 = vmatpush1.msra.mxu0 0.0
  %548 = vmatprep.subr.mxu0 0.0
  %549 = vmatpush1.msra.mxu0 0.0
  %550 = vmatprep.subr.mxu0 %v38
  %551 = vmatpush1.msra.mxu0 %v37
  %552 = vmatprep.subr.mxu0 %v36
  %553 = vmatpush1.msra.mxu0 %v35
  %554 = vmatprep.subr.mxu0 %v34
  %555 = vmatpush1.msra.mxu0 %v33
  %556 = vmatprep.subr.mxu0 %v32
  %557 = vmatpush1.msra.mxu0 %v31
  %558 = vmatprep.subr.mxu0 %v30
  %559 = vmatpush1.msra.mxu0 %v29
  %560 = vmatprep.subr.mxu0 %v28
  %561 = vmatpush1.msra.mxu0 %v27
  %562 = vmatprep.subr.mxu0 %v26
  %563 = vmatpush1.msra.mxu0 %v25
  %564 = vmatprep.subr.mxu0 %v24
  %565 = vmatpush1.msra.mxu0 %v23
  %566 = vmatprep.subr.mxu0 0.0
  %567 = vmatpush2.msra.mxu0 0.0
  %568 = vmatprep.subr.mxu0 0.0
  %569 = vmatpush2.msra.mxu0 0.0
  %570 = vmatprep.subr.mxu0 0.0
  %571 = vmatpush2.msra.mxu0 0.0
  %572 = vmatprep.subr.mxu0 0.0
  %573 = vmatpush2.msra.mxu0 0.0
  %574 = vmatprep.subr.mxu0 0.0
  %575 = vmatpush2.msra.mxu0 0.0
  %576 = vmatprep.subr.mxu0 0.0
  %577 = vmatpush2.msra.mxu0 0.0
  %578 = vmatprep.subr.mxu0 0.0
  %579 = vmatpush2.msra.mxu0 0.0
  %580 = vmatprep.subr.mxu0 0.0
  %581 = vmatpush2.msra.mxu0 0.0
  %582 = vmatprep.subr.mxu0 0.0
  %583 = vmatpush2.msra.mxu0 0.0
  %584 = vmatprep.subr.mxu0 0.0
  %585 = vmatpush2.msra.mxu0 0.0
  %586 = vmatprep.subr.mxu0 0.0
  %587 = vmatpush2.msra.mxu0 0.0
  %588 = vmatprep.subr.mxu0 0.0
  %589 = vmatpush2.msra.mxu0 0.0
  %590 = vmatprep.subr.mxu0 0.0
  %591 = vmatpush2.msra.mxu0 0.0
  %592 = vmatprep.subr.mxu0 0.0
  %593 = vmatpush2.msra.mxu0 0.0
  %594 = vmatprep.subr.mxu0 0.0
  %595 = vmatpush2.msra.mxu0 0.0
  %596 = vmatprep.subr.mxu0 0.0
  %597 = vmatpush2.msra.mxu0 0.0
  %598 = vmatprep.mubr.f32.mxu0 0.0
  %599 = vmatmul.mubr.f32.gmra.mxu0 %v532
  %v600 = vpop.f32.mrf.mxu0
  %v601 = vadd.f32 0.0, %v600
  %v602 = vpop.f32.mrf.mxu0
  %v603 = vadd.f32 0.0, %v602
  %604 = vdwg.mxu0
  %v605 = vadd.f32 %v184, %v601
  %v606 = vadd.f32 %v186, %v603
  %v607 = vxor.u32 %v605, 2147483648
  %v608 = vxor.u32 %v606, 2147483648
  %v609 = vmul.f32 %v607, 1.442695
  %v610 = vpow.pop %v609
  %v611 = vmul.f32 %v608, 1.442695
  %v612 = vpow.pop %v611
  %v613 = vadd.f32 %v610, 1.0
  %v614 = vadd.f32 %v612, 1.0
  %v615 = vrcp.pop %v613
  %v616 = vmul.f32 1.0, %v615
  %v617 = vrcp.pop %v614
  %v618 = vmul.f32 1.0, %v617
  %v619 = vtanh.pop %v606
  %v620 = vmul.f32 %v616, %v524
  %622 = vrot.lane.b32.xlu0 %v619, 64
  %v623 = vpop.permute.xlu0 %622
  %v625 = vmul.f32 %v616, %v623
  %627 = vrot.lane.b32.xlu0 %v625, 64
  %v628 = vpop.permute.xlu0 %627
  %v630 = vadd.f32 %v620, %v628
  %v631 = vtanh.pop %v630
  %633 = vrot.lane.b32.xlu0 %v631, 64
  %v634 = vpop.permute.xlu0 %633
  %v636 = vmul.f32 %v618, %v634
  %v638 = vsel %vm212, %v636, 0
  %640 = vmatprep.subr.mxu0 0.0
  %641 = vmatpush1.msra.mxu0 0.0
  %642 = vmatprep.subr.mxu0 0.0
  %643 = vmatpush1.msra.mxu0 0.0
  %644 = vmatprep.subr.mxu0 0.0
  %645 = vmatpush1.msra.mxu0 0.0
  %646 = vmatprep.subr.mxu0 0.0
  %647 = vmatpush1.msra.mxu0 0.0
  %648 = vmatprep.subr.mxu0 0.0
  %649 = vmatpush1.msra.mxu0 0.0
  %650 = vmatprep.subr.mxu0 0.0
  %651 = vmatpush1.msra.mxu0 0.0
  %652 = vmatprep.subr.mxu0 0.0
  %653 = vmatpush1.msra.mxu0 0.0
  %654 = vmatprep.subr.mxu0 0.0
  %655 = vmatpush1.msra.mxu0 0.0
  %656 = vmatprep.subr.mxu0 %v38
  %657 = vmatpush1.msra.mxu0 %v37
  %658 = vmatprep.subr.mxu0 %v36
  %659 = vmatpush1.msra.mxu0 %v35
  %660 = vmatprep.subr.mxu0 %v34
  %661 = vmatpush1.msra.mxu0 %v33
  %662 = vmatprep.subr.mxu0 %v32
  %663 = vmatpush1.msra.mxu0 %v31
  %664 = vmatprep.subr.mxu0 %v30
  %665 = vmatpush1.msra.mxu0 %v29
  %666 = vmatprep.subr.mxu0 %v28
  %667 = vmatpush1.msra.mxu0 %v27
  %668 = vmatprep.subr.mxu0 %v26
  %669 = vmatpush1.msra.mxu0 %v25
  %670 = vmatprep.subr.mxu0 %v24
  %671 = vmatpush1.msra.mxu0 %v23
  %672 = vmatprep.subr.mxu0 0.0
  %673 = vmatpush2.msra.mxu0 0.0
  %674 = vmatprep.subr.mxu0 0.0
  %675 = vmatpush2.msra.mxu0 0.0
  %676 = vmatprep.subr.mxu0 0.0
  %677 = vmatpush2.msra.mxu0 0.0
  %678 = vmatprep.subr.mxu0 0.0
  %679 = vmatpush2.msra.mxu0 0.0
  %680 = vmatprep.subr.mxu0 0.0
  %681 = vmatpush2.msra.mxu0 0.0
  %682 = vmatprep.subr.mxu0 0.0
  %683 = vmatpush2.msra.mxu0 0.0
  %684 = vmatprep.subr.mxu0 0.0
  %685 = vmatpush2.msra.mxu0 0.0
  %686 = vmatprep.subr.mxu0 0.0
  %687 = vmatpush2.msra.mxu0 0.0
  %688 = vmatprep.subr.mxu0 0.0
  %689 = vmatpush2.msra.mxu0 0.0
  %690 = vmatprep.subr.mxu0 0.0
  %691 = vmatpush2.msra.mxu0 0.0
  %692 = vmatprep.subr.mxu0 0.0
  %693 = vmatpush2.msra.mxu0 0.0
  %694 = vmatprep.subr.mxu0 0.0
  %695 = vmatpush2.msra.mxu0 0.0
  %696 = vmatprep.subr.mxu0 0.0
  %697 = vmatpush2.msra.mxu0 0.0
  %698 = vmatprep.subr.mxu0 0.0
  %699 = vmatpush2.msra.mxu0 0.0
  %700 = vmatprep.subr.mxu0 0.0
  %701 = vmatpush2.msra.mxu0 0.0
  %702 = vmatprep.subr.mxu0 0.0
  %703 = vmatpush2.msra.mxu0 0.0
  %704 = vmatprep.mubr.f32.mxu0 0.0
  %705 = vmatmul.mubr.f32.gmra.mxu0 %v638
  %v706 = vpop.f32.mrf.mxu0
  %v707 = vadd.f32 0.0, %v706
  %v708 = vpop.f32.mrf.mxu0
  %v709 = vadd.f32 0.0, %v708
  %710 = vdwg.mxu0
  %v711 = vadd.f32 %v190, %v707
  %v712 = vadd.f32 %v192, %v709
  %v713 = vxor.u32 %v711, 2147483648
  %v714 = vxor.u32 %v712, 2147483648
  %v715 = vmul.f32 %v713, 1.442695
  %v716 = vpow.pop %v715
  %v717 = vmul.f32 %v714, 1.442695
  %v718 = vpow.pop %v717
  %v719 = vadd.f32 %v716, 1.0
  %v720 = vadd.f32 %v718, 1.0
  %v721 = vrcp.pop %v719
  %v722 = vmul.f32 1.0, %v721
  %v723 = vrcp.pop %v720
  %v724 = vmul.f32 1.0, %v723
  %v725 = vtanh.pop %v712
  %v726 = vmul.f32 %v722, %v630
  %728 = vrot.lane.b32.xlu0 %v725, 64
  %v729 = vpop.permute.xlu0 %728
  %v731 = vmul.f32 %v722, %v729
  %733 = vrot.lane.b32.xlu0 %v731, 64
  %v734 = vpop.permute.xlu0 %733
  %v736 = vadd.f32 %v726, %v734
  %v737 = vtanh.pop %v736
  %739 = vrot.lane.b32.xlu0 %v737, 64
  %v740 = vpop.permute.xlu0 %739
  %v742 = vmul.f32 %v724, %v740
  %v744 = vsel %vm212, %v742, 0
  %746 = vmatprep.subr.mxu0 0.0
  %747 = vmatpush1.msra.mxu0 0.0
  %748 = vmatprep.subr.mxu0 0.0
  %749 = vmatpush1.msra.mxu0 0.0
  %750 = vmatprep.subr.mxu0 0.0
  %751 = vmatpush1.msra.mxu0 0.0
  %752 = vmatprep.subr.mxu0 0.0
  %753 = vmatpush1.msra.mxu0 0.0
  %754 = vmatprep.subr.mxu0 0.0
  %755 = vmatpush1.msra.mxu0 0.0
  %756 = vmatprep.subr.mxu0 0.0
  %757 = vmatpush1.msra.mxu0 0.0
  %758 = vmatprep.subr.mxu0 0.0
  %759 = vmatpush1.msra.mxu0 0.0
  %760 = vmatprep.subr.mxu0 0.0
  %761 = vmatpush1.msra.mxu0 0.0
  %762 = vmatprep.subr.mxu0 %v38
  %763 = vmatpush1.msra.mxu0 %v37
  %764 = vmatprep.subr.mxu0 %v36
  %765 = vmatpush1.msra.mxu0 %v35
  %766 = vmatprep.subr.mxu0 %v34
  %767 = vmatpush1.msra.mxu0 %v33
  %768 = vmatprep.subr.mxu0 %v32
  %769 = vmatpush1.msra.mxu0 %v31
  %770 = vmatprep.subr.mxu0 %v30
  %771 = vmatpush1.msra.mxu0 %v29
  %772 = vmatprep.subr.mxu0 %v28
  %773 = vmatpush1.msra.mxu0 %v27
  %774 = vmatprep.subr.mxu0 %v26
  %775 = vmatpush1.msra.mxu0 %v25
  %776 = vmatprep.subr.mxu0 %v24
  %777 = vmatpush1.msra.mxu0 %v23
  %778 = vmatprep.subr.mxu0 0.0
  %779 = vmatpush2.msra.mxu0 0.0
  %780 = vmatprep.subr.mxu0 0.0
  %781 = vmatpush2.msra.mxu0 0.0
  %782 = vmatprep.subr.mxu0 0.0
  %783 = vmatpush2.msra.mxu0 0.0
  %784 = vmatprep.subr.mxu0 0.0
  %785 = vmatpush2.msra.mxu0 0.0
  %786 = vmatprep.subr.mxu0 0.0
  %787 = vmatpush2.msra.mxu0 0.0
  %788 = vmatprep.subr.mxu0 0.0
  %789 = vmatpush2.msra.mxu0 0.0
  %790 = vmatprep.subr.mxu0 0.0
  %791 = vmatpush2.msra.mxu0 0.0
  %792 = vmatprep.subr.mxu0 0.0
  %793 = vmatpush2.msra.mxu0 0.0
  %794 = vmatprep.subr.mxu0 0.0
  %795 = vmatpush2.msra.mxu0 0.0
  %796 = vmatprep.subr.mxu0 0.0
  %797 = vmatpush2.msra.mxu0 0.0
  %798 = vmatprep.subr.mxu0 0.0
  %799 = vmatpush2.msra.mxu0 0.0
  %800 = vmatprep.subr.mxu0 0.0
  %801 = vmatpush2.msra.mxu0 0.0
  %802 = vmatprep.subr.mxu0 0.0
  %803 = vmatpush2.msra.mxu0 0.0
  %804 = vmatprep.subr.mxu0 0.0
  %805 = vmatpush2.msra.mxu0 0.0
  %806 = vmatprep.subr.mxu0 0.0
  %807 = vmatpush2.msra.mxu0 0.0
  %808 = vmatprep.subr.mxu0 0.0
  %809 = vmatpush2.msra.mxu0 0.0
  %810 = vmatprep.mubr.f32.mxu0 0.0
  %811 = vmatmul.mubr.f32.gmra.mxu0 %v744
  %v812 = vpop.f32.mrf.mxu0
  %v813 = vadd.f32 0.0, %v812
  %v814 = vpop.f32.mrf.mxu0
  %v815 = vadd.f32 0.0, %v814
  %816 = vdwg.mxu0
  %v817 = vadd.f32 %v196, %v813
  %v818 = vadd.f32 %v198, %v815
  %v819 = vxor.u32 %v817, 2147483648
  %v820 = vxor.u32 %v818, 2147483648
  %v821 = vmul.f32 %v819, 1.442695
  %v822 = vpow.pop %v821
  %v823 = vmul.f32 %v820, 1.442695
  %v824 = vpow.pop %v823
  %v825 = vadd.f32 %v822, 1.0
  %v826 = vadd.f32 %v824, 1.0
  %v827 = vrcp.pop %v825
  %v828 = vmul.f32 1.0, %v827
  %v829 = vrcp.pop %v826
  %v830 = vmul.f32 1.0, %v829
  %v831 = vtanh.pop %v818
  %v832 = vmul.f32 %v828, %v736
  %834 = vrot.lane.b32.xlu0 %v831, 64
  %v835 = vpop.permute.xlu0 %834
  %v837 = vmul.f32 %v828, %v835
  %839 = vrot.lane.b32.xlu0 %v837, 64
  %v840 = vpop.permute.xlu0 %839
  %v842 = vadd.f32 %v832, %v840
  %v843 = vtanh.pop %v842
  %845 = vrot.lane.b32.xlu0 %v843, 64
  %v846 = vpop.permute.xlu0 %845
  %v848 = vmul.f32 %v830, %v846
  %v850 = vsel %vm212, %v848, 0
  %852 = vmatprep.subr.mxu0 0.0
  %853 = vmatpush1.msra.mxu0 0.0
  %854 = vmatprep.subr.mxu0 0.0
  %855 = vmatpush1.msra.mxu0 0.0
  %856 = vmatprep.subr.mxu0 0.0
  %857 = vmatpush1.msra.mxu0 0.0
  %858 = vmatprep.subr.mxu0 0.0
  %859 = vmatpush1.msra.mxu0 0.0
  %860 = vmatprep.subr.mxu0 0.0
  %861 = vmatpush1.msra.mxu0 0.0
  %862 = vmatprep.subr.mxu0 0.0
  %863 = vmatpush1.msra.mxu0 0.0
  %864 = vmatprep.subr.mxu0 0.0
  %865 = vmatpush1.msra.mxu0 0.0
  %866 = vmatprep.subr.mxu0 0.0
  %867 = vmatpush1.msra.mxu0 0.0
  %868 = vmatprep.subr.mxu0 %v38
  %869 = vmatpush1.msra.mxu0 %v37
  %870 = vmatprep.subr.mxu0 %v36
  %871 = vmatpush1.msra.mxu0 %v35
  %872 = vmatprep.subr.mxu0 %v34
  %873 = vmatpush1.msra.mxu0 %v33
  %874 = vmatprep.subr.mxu0 %v32
  %875 = vmatpush1.msra.mxu0 %v31
  %876 = vmatprep.subr.mxu0 %v30
  %877 = vmatpush1.msra.mxu0 %v29
  %878 = vmatprep.subr.mxu0 %v28
  %879 = vmatpush1.msra.mxu0 %v27
  %880 = vmatprep.subr.mxu0 %v26
  %881 = vmatpush1.msra.mxu0 %v25
  %882 = vmatprep.subr.mxu0 %v24
  %883 = vmatpush1.msra.mxu0 %v23
  %884 = vmatprep.subr.mxu0 0.0
  %885 = vmatpush2.msra.mxu0 0.0
  %886 = vmatprep.subr.mxu0 0.0
  %887 = vmatpush2.msra.mxu0 0.0
  %888 = vmatprep.subr.mxu0 0.0
  %889 = vmatpush2.msra.mxu0 0.0
  %890 = vmatprep.subr.mxu0 0.0
  %891 = vmatpush2.msra.mxu0 0.0
  %892 = vmatprep.subr.mxu0 0.0
  %893 = vmatpush2.msra.mxu0 0.0
  %894 = vmatprep.subr.mxu0 0.0
  %895 = vmatpush2.msra.mxu0 0.0
  %896 = vmatprep.subr.mxu0 0.0
  %897 = vmatpush2.msra.mxu0 0.0
  %898 = vmatprep.subr.mxu0 0.0
  %899 = vmatpush2.msra.mxu0 0.0
  %900 = vmatprep.subr.mxu0 0.0
  %901 = vmatpush2.msra.mxu0 0.0
  %902 = vmatprep.subr.mxu0 0.0
  %903 = vmatpush2.msra.mxu0 0.0
  %904 = vmatprep.subr.mxu0 0.0
  %905 = vmatpush2.msra.mxu0 0.0
  %906 = vmatprep.subr.mxu0 0.0
  %907 = vmatpush2.msra.mxu0 0.0
  %908 = vmatprep.subr.mxu0 0.0
  %909 = vmatpush2.msra.mxu0 0.0
  %910 = vmatprep.subr.mxu0 0.0
  %911 = vmatpush2.msra.mxu0 0.0
  %912 = vmatprep.subr.mxu0 0.0
  %913 = vmatpush2.msra.mxu0 0.0
  %914 = vmatprep.subr.mxu0 0.0
  %915 = vmatpush2.msra.mxu0 0.0
  %916 = vmatprep.mubr.f32.mxu0 0.0
  %917 = vmatmul.mubr.f32.gmra.mxu0 %v850
  %v918 = vpop.f32.mrf.mxu0
  %v919 = vadd.f32 0.0, %v918
  %v920 = vpop.f32.mrf.mxu0
  %v921 = vadd.f32 0.0, %v920
  %922 = vdwg.mxu0
  %v923 = vadd.f32 %v202, %v919
  %v924 = vadd.f32 %v204, %v921
  %v925 = vxor.u32 %v923, 2147483648
  %v926 = vxor.u32 %v924, 2147483648
  %v927 = vmul.f32 %v925, 1.442695
  %v928 = vpow.pop %v927
  %v929 = vmul.f32 %v926, 1.442695
  %v930 = vpow.pop %v929
  %v931 = vadd.f32 %v928, 1.0
  %v932 = vadd.f32 %v930, 1.0
  %v933 = vrcp.pop %v931
  %v934 = vmul.f32 1.0, %v933
  %v935 = vrcp.pop %v932
  %v936 = vmul.f32 1.0, %v935
  %v937 = vtanh.pop %v924
  %v938 = vmul.f32 %v934, %v842
  %940 = vrot.lane.b32.xlu0 %v937, 64
  %v941 = vpop.permute.xlu0 %940
  %v943 = vmul.f32 %v934, %v941
  %945 = vrot.lane.b32.xlu0 %v943, 64
  %v946 = vpop.permute.xlu0 %945
  %v948 = vadd.f32 %v938, %v946
  %v949 = vtanh.pop %v948
  %951 = vrot.lane.b32.xlu0 %v949, 64
  %v952 = vpop.permute.xlu0 %951
  %v954 = vmul.f32 %v936, %v952
  %v956 = vsel %vm212, %v954, 0
  %958 = vmatprep.subr.mxu0 0.0
  %959 = vmatpush1.msra.mxu0 0.0
  %960 = vmatprep.subr.mxu0 0.0
  %961 = vmatpush1.msra.mxu0 0.0
  %962 = vmatprep.subr.mxu0 0.0
  %963 = vmatpush1.msra.mxu0 0.0
  %964 = vmatprep.subr.mxu0 0.0
  %965 = vmatpush1.msra.mxu0 0.0
  %966 = vmatprep.subr.mxu0 0.0
  %967 = vmatpush1.msra.mxu0 0.0
  %968 = vmatprep.subr.mxu0 0.0
  %969 = vmatpush1.msra.mxu0 0.0
  %970 = vmatprep.subr.mxu0 0.0
  %971 = vmatpush1.msra.mxu0 0.0
  %972 = vmatprep.subr.mxu0 0.0
  %973 = vmatpush1.msra.mxu0 0.0
  %974 = vmatprep.subr.mxu0 %v38
  %975 = vmatpush1.msra.mxu0 %v37
  %976 = vmatprep.subr.mxu0 %v36
  %977 = vmatpush1.msra.mxu0 %v35
  %978 = vmatprep.subr.mxu0 %v34
  %979 = vmatpush1.msra.mxu0 %v33
  %980 = vmatprep.subr.mxu0 %v32
  %981 = vmatpush1.msra.mxu0 %v31
  %982 = vmatprep.subr.mxu0 %v30
  %983 = vmatpush1.msra.mxu0 %v29
  %984 = vmatprep.subr.mxu0 %v28
  %985 = vmatpush1.msra.mxu0 %v27
  %986 = vmatprep.subr.mxu0 %v26
  %987 = vmatpush1.msra.mxu0 %v25
  %988 = vmatprep.subr.mxu0 %v24
  %989 = vmatpush1.msra.mxu0 %v23
  %990 = vmatprep.subr.mxu0 0.0
  %991 = vmatpush2.msra.mxu0 0.0
  %992 = vmatprep.subr.mxu0 0.0
  %993 = vmatpush2.msra.mxu0 0.0
  %994 = vmatprep.subr.mxu0 0.0
  %995 = vmatpush2.msra.mxu0 0.0
  %996 = vmatprep.subr.mxu0 0.0
  %997 = vmatpush2.msra.mxu0 0.0
  %998 = vmatprep.subr.mxu0 0.0
  %999 = vmatpush2.msra.mxu0 0.0
  %1000 = vmatprep.subr.mxu0 0.0
  %1001 = vmatpush2.msra.mxu0 0.0
  %1002 = vmatprep.subr.mxu0 0.0
  %1003 = vmatpush2.msra.mxu0 0.0
  %1004 = vmatprep.subr.mxu0 0.0
  %1005 = vmatpush2.msra.mxu0 0.0
  %1006 = vmatprep.subr.mxu0 0.0
  %1007 = vmatpush2.msra.mxu0 0.0
  %1008 = vmatprep.subr.mxu0 0.0
  %1009 = vmatpush2.msra.mxu0 0.0
  %1010 = vmatprep.subr.mxu0 0.0
  %1011 = vmatpush2.msra.mxu0 0.0
  %1012 = vmatprep.subr.mxu0 0.0
  %1013 = vmatpush2.msra.mxu0 0.0
  %1014 = vmatprep.subr.mxu0 0.0
  %1015 = vmatpush2.msra.mxu0 0.0
  %1016 = vmatprep.subr.mxu0 0.0
  %1017 = vmatpush2.msra.mxu0 0.0
  %1018 = vmatprep.subr.mxu0 0.0
  %1019 = vmatpush2.msra.mxu0 0.0
  %1020 = vmatprep.subr.mxu0 0.0
  %1021 = vmatpush2.msra.mxu0 0.0
  %1022 = vmatprep.mubr.f32.mxu0 0.0
  %1023 = vmatmul.mubr.f32.gmra.mxu0 %v956
  %v1024 = vpop.f32.mrf.mxu0
  %v1025 = vadd.f32 0.0, %v1024
  %v1026 = vpop.f32.mrf.mxu0
  %v1027 = vadd.f32 0.0, %v1026
  %1028 = vdwg.mxu0
  %v1029 = vadd.f32 %v208, %v1025
  %v1030 = vadd.f32 %v210, %v1027
  %v1031 = vxor.u32 %v1029, 2147483648
  %v1032 = vxor.u32 %v1030, 2147483648
  %v1033 = vmul.f32 %v1031, 1.442695
  %v1034 = vpow.pop %v1033
  %v1035 = vmul.f32 %v1032, 1.442695
  %v1036 = vpow.pop %v1035
  %v1037 = vadd.f32 %v1034, 1.0
  %v1038 = vadd.f32 %v1036, 1.0
  %v1039 = vrcp.pop %v1037
  %v1040 = vmul.f32 1.0, %v1039
  %v1041 = vrcp.pop %v1038
  %v1042 = vmul.f32 1.0, %v1041
  %v1043 = vtanh.pop %v1030
  %v1044 = vmul.f32 %v1040, %v948
  %1046 = vrot.lane.b32.xlu0 %v1043, 64
  %v1047 = vpop.permute.xlu0 %1046
  %v1049 = vmul.f32 %v1040, %v1047
  %1051 = vrot.lane.b32.xlu0 %v1049, 64
  %v1052 = vpop.permute.xlu0 %1051
  %v1054 = vadd.f32 %v1044, %v1052
  %v1055 = vtanh.pop %v1054
  %1057 = vrot.lane.b32.xlu0 %v1055, 64
  %v1058 = vpop.permute.xlu0 %1057
  %v1060 = vmul.f32 %v1042, %v1058
  %v1061 = vld [vmem:[%s4] sm:$0xff]
  %v1062 = vld [vmem:[%s4 + $0x8] sm:$0xff]
  %v1063 = vld [vmem:[%s4 + $0x10] sm:$0xff]
  %v1064 = vld [vmem:[%s4 + $0x18] sm:$0xff]
  %v1065 = vld [vmem:[%s4 + $0x20] sm:$0xff]
  %v1066 = vld [vmem:[%s4 + $0x28] sm:$0xff]
  %v1067 = vld [vmem:[%s4 + $0x30] sm:$0xff]
  %v1068 = vld [vmem:[%s4 + $0x38] sm:$0xff]
  %v1069 = vld [vmem:[%s5] sm:$0x1]
  %v1071 = vlaneseq
  %v1072 = vshrl.u32 %v1071, 7
  %v1073 = vsub.s32 0, %v1072
  %v1074 = vrot.slane %v1069, %v1073
  %v1077 = vsel %vm212, %v1060, 0
  %1079 = vmatprep.subr.mxu0 0.0
  %1080 = vmatpush1.msra.mxu0 0.0
  %1081 = vmatprep.subr.mxu0 0.0
  %1082 = vmatpush1.msra.mxu0 0.0
  %1083 = vmatprep.subr.mxu0 0.0
  %1084 = vmatpush1.msra.mxu0 0.0
  %1085 = vmatprep.subr.mxu0 0.0
  %1086 = vmatpush1.msra.mxu0 0.0
  %1087 = vmatprep.subr.mxu0 0.0
  %1088 = vmatpush1.msra.mxu0 0.0
  %1089 = vmatprep.subr.mxu0 0.0
  %1090 = vmatpush1.msra.mxu0 0.0
  %1091 = vmatprep.subr.mxu0 0.0
  %1092 = vmatpush1.msra.mxu0 0.0
  %1093 = vmatprep.subr.mxu0 0.0
  %1094 = vmatpush1.msra.mxu0 0.0
  %1095 = vmatprep.subr.mxu0 0.0
  %1096 = vmatpush1.msra.mxu0 %v1068
  %1097 = vmatprep.subr.mxu0 0.0
  %1098 = vmatpush1.msra.mxu0 %v1067
  %1099 = vmatprep.subr.mxu0 0.0
  %1100 = vmatpush1.msra.mxu0 %v1066
  %1101 = vmatprep.subr.mxu0 0.0
  %1102 = vmatpush1.msra.mxu0 %v1065
  %1103 = vmatprep.subr.mxu0 0.0
  %1104 = vmatpush1.msra.mxu0 %v1064
  %1105 = vmatprep.subr.mxu0 0.0
  %1106 = vmatpush1.msra.mxu0 %v1063
  %1107 = vmatprep.subr.mxu0 0.0
  %1108 = vmatpush1.msra.mxu0 %v1062
  %1109 = vmatprep.subr.mxu0 0.0
  %1110 = vmatpush1.msra.mxu0 %v1061
  %1111 = vmatprep.subr.mxu0 0.0
  %1112 = vmatpush2.msra.mxu0 0.0
  %1113 = vmatprep.subr.mxu0 0.0
  %1114 = vmatpush2.msra.mxu0 0.0
  %1115 = vmatprep.subr.mxu0 0.0
  %1116 = vmatpush2.msra.mxu0 0.0
  %1117 = vmatprep.subr.mxu0 0.0
  %1118 = vmatpush2.msra.mxu0 0.0
  %1119 = vmatprep.subr.mxu0 0.0
  %1120 = vmatpush2.msra.mxu0 0.0
  %1121 = vmatprep.subr.mxu0 0.0
  %1122 = vmatpush2.msra.mxu0 0.0
  %1123 = vmatprep.subr.mxu0 0.0
  %1124 = vmatpush2.msra.mxu0 0.0
  %1125 = vmatprep.subr.mxu0 0.0
  %1126 = vmatpush2.msra.mxu0 0.0
  %1127 = vmatprep.subr.mxu0 0.0
  %1128 = vmatpush2.msra.mxu0 0.0
  %1129 = vmatprep.subr.mxu0 0.0
  %1130 = vmatpush2.msra.mxu0 0.0
  %1131 = vmatprep.subr.mxu0 0.0
  %1132 = vmatpush2.msra.mxu0 0.0
  %1133 = vmatprep.subr.mxu0 0.0
  %1134 = vmatpush2.msra.mxu0 0.0
  %1135 = vmatprep.subr.mxu0 0.0
  %1136 = vmatpush2.msra.mxu0 0.0
  %1137 = vmatprep.subr.mxu0 0.0
  %1138 = vmatpush2.msra.mxu0 0.0
  %1139 = vmatprep.subr.mxu0 0.0
  %1140 = vmatpush2.msra.mxu0 0.0
  %1141 = vmatprep.subr.mxu0 0.0
  %1142 = vmatpush2.msra.mxu0 0.0
  %1143 = vmatprep.mubr.f32.mxu0 0.0
  %1144 = vmatmul.mubr.f32.gmra.mxu0 %v1077
  %v1145 = vpop.f32.mrf.mxu0
  %v1146 = vadd.f32 %v1074, %v1145
  %v1147 = vpop.f32.mrf.mxu0
  %1148 = vdwg.mxu0
  %1149 = vst [vmem:[%s6] sm:$0xff] %v1146
  // Predicated region
  $region26: #{lstm_forward.1} parent=0 // pred_check
    _
  $region27: #{lstm_forward.1} parent=0 // pred_check_branch
    %1151 = sbr.rel (0) target = $region29
  $region28: #{lstm_forward.1} parent=0 // pred_region
    _
  $region29: #{lstm_forward.1} parent=0 // pred_fallthru
    _
  // Predicated region
  $region30: #{lstm_forward.1} parent=0 // pred_check
    _
  $region31: #{lstm_forward.1} parent=0 // pred_check_branch
    %1153 = sbr.rel (0) target = $region33
  $region32: #{lstm_forward.1} parent=0 // pred_region
    _
  $region33: #{lstm_forward.1} parent=0 // pred_fallthru
    _

</llo_original>
